<compile_context>
chip_gen: v5e
topology: v5e:2x2
jax: 0.10.0
libtpu: 0.0.40
codegen_flags: <defaults>
</compile_context>

<pallas_src>
import functools
import math

import jax
import jax.numpy as jnp
from jax.experimental import pallas as pl
from jax.experimental.pallas import tpu as pltpu


def _sigmoid(x):
    # sigmoid(x) = 0.5 * (tanh(x/2) + 1): single EUP op, no VALU divide.
    return 0.5 * jnp.tanh(0.5 * x) + 0.5


def _minmax_rolled_kernel(x_ref, o_ref, *, dim, group):
    """Lane-folded layout: (TR, W) tiles, W = k*group, group = 2*dim, W%128==0.

    Lane position p = lane % group holds the z logit of some (box, coord) when
    p < dim and the matching Z logit when p >= dim.  The zZ min/max is thus a
    partner-lane swap (distance +/- dim) + select, and the result is written
    with a single full-width, unmasked, lane-dense store."""
    x = x_ref[...]
    s = _sigmoid(x)
    w = x.shape[-1]
    # pltpu.roll follows np.roll semantics: roll(s, d)[l] == s[(l - d) % w].
    fwd = pltpu.roll(s, shift=w - dim, axis=1)    # fwd[l] = s[(l + dim) % w]
    bwd = pltpu.roll(s, shift=dim, axis=1)        # bwd[l] = s[(l - dim) % w]
    lane = jax.lax.broadcasted_iota(jnp.int32, x.shape, 1)
    if group & (group - 1) == 0:                  # power-of-two group width
        pos = jnp.bitwise_and(lane, group - 1)
    else:
        pos = lane % group
    is_lo = pos < dim
    # z half: partner is +dim lanes away (same group); Z half: -dim lanes away.
    out = jnp.where(is_lo, jnp.minimum(s, fwd), jnp.maximum(s, bwd))
    o_ref[...] = out.astype(o_ref.dtype)


def _minmax_halves_kernel(x_ref, o_ref, *, dim):
    """Unfolded layout: (TR, 2*dim) tiles; columns [:dim] are z logits, [dim:]
    the matching Z logits.  Writes the two halves straight into the output
    (no concatenate temp).  Stores are fully dense when dim % 128 == 0."""
    s = _sigmoid(x_ref[...])
    lo = s[:, :dim]
    hi = s[:, dim:]
    o_ref[:, :dim] = jnp.minimum(lo, hi).astype(o_ref.dtype)
    o_ref[:, dim:] = jnp.maximum(lo, hi).astype(o_ref.dtype)


def _vmem_capacity_bytes(default=64 << 20):
    try:
        info = pltpu.get_tpu_info()
        cap = getattr(info, "vmem_capacity_bytes", None)
        if cap:
            return int(cap)
    except Exception:
        pass
    return default


def _choose_block_rows(num_rows, row_bytes, target_bytes, *, min_steps=4):
    """Row-tile size: multiple of 8, near target_bytes.  Never returns a block
    bigger than needed to hold the whole array, never smaller than 8 rows, and
    keeps >= min_steps grid steps for large arrays (v7x megacore balance)."""
    rows = (target_bytes // max(1, row_bytes)) // 8 * 8
    if rows <= 0:
        rows = 8                                   # minimum legal sublane tile
    if rows >= num_rows:
        return num_rows                            # whole array fits the target
    if num_rows * row_bytes > (4 << 20) and num_rows >= min_steps * 8:
        rows = min(rows, max(8, (num_rows // min_steps) // 8 * 8))
    return rows


def _reference_forward(boxes_param):
    s = jax.nn.sigmoid(boxes_param)
    return jnp.stack((jnp.min(s, axis=2), jnp.max(s, axis=2)), axis=2)


def minmax_sigmoid_boxes_forward(boxes_param, *, min_pallas_elems=1 << 20):
    """boxes_param: (num_models, num_boxes, 2, dim) float32 logits.

    Identical semantics to MinMaxSigmoidBoxes.forward (which ignores
    box_indices and always returns every box)."""
    M, N, two, D = boxes_param.shape
    assert two == 2
    R, C = M * N, 2 * D
    total = R * C

    # Tiny inputs: fused XLA elementwise beats pallas_call fixed overhead.
    if total < min_pallas_elems:
        return _reference_forward(boxes_param)

    itemsize = jnp.dtype(boxes_param.dtype).itemsize
    vmem_cap = _vmem_capacity_bytes()
    target_bytes = max(64 << 10, min(1 << 20, vmem_cap // 32))
    vmem_limit = int(min(vmem_cap // 2, 32 << 20))

    # Lane-dense fold: make the last dim a multiple of 128 when possible.
    k = 128 // math.gcd(C, 128)                    # k*C == lcm(2D, 128)
    use_fold = (D % 128 != 0) and (R % k == 0)
    if use_fold:
        Rk, W = R // k, k * C
        kernel = functools.partial(_minmax_rolled_kernel, dim=D, group=C)
    else:
        Rk, W = R, C
        kernel = functools.partial(_minmax_halves_kernel, dim=D)

    row_bytes = W * itemsize
    block_rows = _choose_block_rows(Rk, row_bytes, target_bytes)
    if block_rows * row_bytes * 6 > vmem_limit:
        # TODO(synk): extremely wide rows (dim ~> 64K) would need column tiling
        # on top of the zZ pairing; fall back to plain XLA for those shapes.
        return _reference_forward(boxes_param)

    x2 = boxes_param.reshape(Rk, W)                # contiguous view, no copy

    out2 = pl.pallas_call(
        kernel,
        out_shape=jax.ShapeDtypeStruct((Rk, W), boxes_param.dtype),
        grid_spec=pltpu.PrefetchScalarGridSpec(
            num_scalar_prefetch=0,
            grid=(pl.cdiv(Rk, block_rows),),
            in_specs=[pl.BlockSpec((block_rows, W), lambda i: (i, 0))],
            out_specs=pl.BlockSpec((block_rows, W), lambda i: (i, 0)),
        ),
        compiler_params=pltpu.CompilerParams(
            dimension_semantics=("parallel",),
            vmem_limit_bytes=vmem_limit,
        ),
    )(x2)

    return out2.reshape(M, N, 2, D)                # contiguous view back


def init_minmax_sigmoid_boxes_params(key, num_models, num_boxes, dim):
    """Deterministic synthetic init mimicking MinMaxSigmoidBoxes.__init__:
    draw valid unit-cube boxes (0 < z < Z < 1), then store their logits."""
    # TODO(synk): the original Gibbs-sampling unit-cube init is a host-side,
    # one-time construction detail; a uniform valid-box init stands in for it.
    k1, k2 = jax.random.split(key)
    z = jax.random.uniform(k1, (num_models, num_boxes, dim),
                           dtype=jnp.float32, minval=0.05, maxval=0.45)
    side = jax.random.uniform(k2, (num_models, num_boxes, dim),
                              dtype=jnp.float32, minval=0.05, maxval=0.45)
    unit_boxes = jnp.stack((z, z + side), axis=2)          # (M, N, 2, D) in (0,1)
    return jnp.log(unit_boxes / (1.0 - unit_boxes))        # logits


if __name__ == "__main__":
    key = jax.random.PRNGKey(0)

    # dim=32 exercises the lane-folded (roll + select) path; dim=128 exercises
    # the aligned direct-halves path.
    cases = [(2, 64, 32), (2, 16, 128)]
    for idx, (num_models, num_boxes, dim) in enumerate(cases):
        boxes_param = init_minmax_sigmoid_boxes_params(
            jax.random.fold_in(key, idx), num_models, num_boxes, dim)
        # min_pallas_elems=0 forces the Pallas path at these toy shapes
        # (the production default gates tiny inputs to fused XLA).
        out = minmax_sigmoid_boxes_forward(boxes_param, min_pallas_elems=0)
        out = jax.block_until_ready(out)
        ref = _reference_forward(boxes_param)
        assert out.shape == (num_models, num_boxes, 2, dim)
        assert jnp.allclose(out, ref, atol=1e-6), f"mismatch vs reference (case {idx})"

    # Tiny-input gate: falls back to the plain XLA expression.
    small = init_minmax_sigmoid_boxes_params(key, 2, 4, 8)
    out_small = jax.block_until_ready(minmax_sigmoid_boxes_forward(small))
    assert jnp.allclose(out_small, _reference_forward(small), atol=1e-6)

    print("KERNEL_OK")
</pallas_src>

<mosaic_0001>
module attributes {stable_mosaic.version = 11 : i64} {
  func.func @_minmax_rolled_kernel(%arg0: i32, %arg1: memref<64x128xf32, #tpu.memory_space<vmem>>, %arg2: memref<64x128xf32, #tpu.memory_space<vmem>>) attributes {dimension_semantics = [#tpu.dimension_semantics<parallel>], iteration_bounds = array<i64: 1>, scalar_prefetch = 0 : i64, scratch_operands = 0 : i64, tpu.core_type = #tpu.core_type<tc>, window_params = [{transform_indices = @transform_0, window_bounds = array<i64: 64, 128>}, {transform_indices = @transform_1, window_bounds = array<i64: 64, 128>}]} {
    %c0 = arith.constant 0 : index
    %c0_0 = arith.constant 0 : index
    %0 = vector.load %arg1[%c0, %c0_0] : memref<64x128xf32, #tpu.memory_space<vmem>>, vector<64x128xf32>
    %cst = arith.constant 5.000000e-01 : f32
    %1 = vector.broadcast %cst : f32 to vector<64x128xf32>
    %2 = arith.mulf %1, %0 : vector<64x128xf32>
    %3 = math.tanh %2 : vector<64x128xf32>
    %cst_1 = arith.constant 5.000000e-01 : f32
    %4 = vector.broadcast %cst_1 : f32 to vector<64x128xf32>
    %5 = arith.mulf %4, %3 : vector<64x128xf32>
    %cst_2 = arith.constant 5.000000e-01 : f32
    %6 = vector.broadcast %cst_2 : f32 to vector<64x128xf32>
    %7 = arith.addf %5, %6 : vector<64x128xf32>
    %c96_i32 = arith.constant 96 : i32
    %8 = tpu.dynamic_rotate %7 by %c96_i32 dim 1 : vector<64x128xf32>, i32 -> vector<64x128xf32>
    %c32_i32 = arith.constant 32 : i32
    %9 = tpu.dynamic_rotate %7 by %c32_i32 dim 1 : vector<64x128xf32>, i32 -> vector<64x128xf32>
    %10 = tpu.iota {dimensions = array<i32: 1>} : vector<64x128xi32>
    %c63_i32 = arith.constant 63 : i32
    %11 = vector.broadcast %c63_i32 : i32 to vector<64x128xi32>
    %12 = arith.andi %10, %11 : vector<64x128xi32>
    %c32_i32_3 = arith.constant 32 : i32
    %13 = vector.broadcast %c32_i32_3 : i32 to vector<64x128xi32>
    %14 = arith.cmpi slt, %12, %13 : vector<64x128xi32>
    %15 = arith.minimumf %7, %8 : vector<64x128xf32>
    %16 = arith.maximumf %7, %9 : vector<64x128xf32>
    %17 = arith.select %14, %15, %16 : vector<64x128xi1>, vector<64x128xf32>
    %c0_4 = arith.constant 0 : index
    %c0_5 = arith.constant 0 : index
    %18 = vector.load %arg2[%c0_4, %c0_5] : memref<64x128xf32, #tpu.memory_space<vmem>>, vector<64x128xf32>
    tpu.vector_store %arg2[%c0_4, %c0_5], %17 {strides = array<i32>} : memref<64x128xf32, #tpu.memory_space<vmem>>, vector<64x128xf32>,
    return
  }
  func.func @transform_0(%arg0: i32) -> (i32, i32) {
    %c0_i32 = arith.constant 0 : i32
    %c0_i32_0 = arith.constant 0 : i32
    return %arg0, %c0_i32 : i32, i32
  }
  func.func @transform_1(%arg0: i32) -> (i32, i32) {
    %c0_i32 = arith.constant 0 : i32
    %c0_i32_0 = arith.constant 0 : i32
    return %arg0, %c0_i32 : i32, i32
  }
}

</mosaic_0001>

<llo_original>
// kernel: tpu_custom_call.1
$region0: #{tpu_custom_call.1}
  #allocation0 [shape = 'u32[]', space=smem, size = 0x4, offset = 0x4, fixed_abs, tag = 'smem constant byte address 0x4 - core index']
  #allocation1 [shape = 'u32[72,128]{1,0:T(1,128)}', space=vmem, size = 0x9000, scoped, tag = 'internal scratch']
  %s0 = inlined_call_operand.hbm [shape: f32[64,128], index: 0, kind: input, shape index: {}]
  %s1 = inlined_call_operand.hbm [shape: f32[64,128], index: 1, kind: output, shape index: {}]
  %s2 = sld [smem:[#allocation0]]
  $region18: #{tpu_custom_call.1} parent=0
    _
  %s4 = ssub.s32 1, %s2
  %s5 = scalar_select 0, %s4, %s2
  $region1: #{tpu_custom_call.1} parent=0
    #allocation2 [shape = 'u8[32768]{0}', space=vmem, size = 0x8000, scoped, tag = 'input window, operand 0, single buffered']
    #allocation3 [shape = 's32[1]{0}', space=sflag, size = 0x4, scoped, tag = 'scoped memory for tpu_custom_call.1']
    #allocation4 [shape = 's32[1]{0}', space=sflag, size = 0x4, scoped, tag = 'scoped memory for tpu_custom_call.1']
    #allocation5 [shape = 'u8[32768]{0}', space=vmem, size = 0x8000, scoped, tag = 'output window, operand 0, single buffered']
    %6 = vsyncpa [#allocation3], 0
    %7 = vsyncpa [#allocation4], 0
    // Predicated region
    $region2: #{tpu_custom_call.1} parent=1 // pred_check
      _
    $region3: #{tpu_custom_call.1} parent=1 // pred_check_branch
      %9 = sbr.rel (0) target = $region5
    $region4: #{tpu_custom_call.1} parent=1 // pred_region
      %11 = vsyncadd [#allocation3], 0
      %s12 = sshll.u32 %s0, 4
      %s13 = int_to_ptr.hbm [resolvable:$true] %s12
      %s14 = sshll.u32 [#allocation2], 4
      %s15 = int_to_ptr.vmem [resolvable:$true] %s14
      %20 = dma.hbm_to_vmem [thread:$0]  %s13, 1024, %s15, [#allocation3], 128, 128, 8
    $region5: #{tpu_custom_call.1} parent=1 // pred_fallthru
      _
    // Predicated region
    $region6: #{tpu_custom_call.1} parent=1 // pred_check
      _
    $region7: #{tpu_custom_call.1} parent=1 // pred_check_branch
      %22 = sbr.rel (0) target = $region9
    $region8: #{tpu_custom_call.1} parent=1 // pred_region
      %24 = dma.done [#allocation3], 1024
    $region9: #{tpu_custom_call.1} parent=1 // pred_fallthru
      _
    %v25 = vld [vmem:[#allocation2] sm:$0xff]
    %v26 = vld [vmem:[#allocation2 + $0x8] sm:$0xff]
    %v27 = vld [vmem:[#allocation2 + $0x10] sm:$0xff]
    %v28 = vld [vmem:[#allocation2 + $0x18] sm:$0xff]
    %v29 = vld [vmem:[#allocation2 + $0x20] sm:$0xff]
    %v30 = vld [vmem:[#allocation2 + $0x28] sm:$0xff]
    %v31 = vld [vmem:[#allocation2 + $0x30] sm:$0xff]
    %v32 = vld [vmem:[#allocation2 + $0x38] sm:$0xff]
    %v33 = vmul.f32 %v25, 0.5
    %v34 = vmul.f32 %v26, 0.5
    %v35 = vmul.f32 %v27, 0.5
    %v36 = vmul.f32 %v28, 0.5
    %v37 = vmul.f32 %v29, 0.5
    %v38 = vmul.f32 %v30, 0.5
    %v39 = vmul.f32 %v31, 0.5
    %v40 = vmul.f32 %v32, 0.5
    %v41 = vtanh.pop %v33
    %v42 = vtanh.pop %v34
    %v43 = vtanh.pop %v35
    %v44 = vtanh.pop %v36
    %v45 = vtanh.pop %v37
    %v46 = vtanh.pop %v38
    %v47 = vtanh.pop %v39
    %v48 = vtanh.pop %v40
    %v49 = vmul.f32 %v41, 0.5
    %v50 = vmul.f32 %v42, 0.5
    %v51 = vmul.f32 %v43, 0.5
    %v52 = vmul.f32 %v44, 0.5
    %v53 = vmul.f32 %v45, 0.5
    %v54 = vmul.f32 %v46, 0.5
    %v55 = vmul.f32 %v47, 0.5
    %v56 = vmul.f32 %v48, 0.5
    %v57 = vadd.f32 %v49, 0.5
    %v58 = vadd.f32 %v50, 0.5
    %v59 = vadd.f32 %v51, 0.5
    %v60 = vadd.f32 %v52, 0.5
    %v61 = vadd.f32 %v53, 0.5
    %v62 = vadd.f32 %v54, 0.5
    %v63 = vadd.f32 %v55, 0.5
    %v64 = vadd.f32 %v56, 0.5
    %65 = vrot.lane.b32.xlu0 %v57, 96
    %v66 = vpop.permute.xlu0 %65
    %67 = vrot.lane.b32.xlu0 %v58, 96
    %v68 = vpop.permute.xlu0 %67
    %69 = vrot.lane.b32.xlu0 %v59, 96
    %v70 = vpop.permute.xlu0 %69
    %71 = vrot.lane.b32.xlu0 %v60, 96
    %v72 = vpop.permute.xlu0 %71
    %73 = vrot.lane.b32.xlu0 %v61, 96
    %v74 = vpop.permute.xlu0 %73
    %75 = vrot.lane.b32.xlu0 %v62, 96
    %v76 = vpop.permute.xlu0 %75
    %77 = vrot.lane.b32.xlu0 %v63, 96
    %v78 = vpop.permute.xlu0 %77
    %79 = vrot.lane.b32.xlu0 %v64, 96
    %v80 = vpop.permute.xlu0 %79
    %81 = vrot.lane.b32.xlu0 %v57, 32
    %v82 = vpop.permute.xlu0 %81
    %83 = vrot.lane.b32.xlu0 %v58, 32
    %v84 = vpop.permute.xlu0 %83
    %85 = vrot.lane.b32.xlu0 %v59, 32
    %v86 = vpop.permute.xlu0 %85
    %87 = vrot.lane.b32.xlu0 %v60, 32
    %v88 = vpop.permute.xlu0 %87
    %89 = vrot.lane.b32.xlu0 %v61, 32
    %v90 = vpop.permute.xlu0 %89
    %91 = vrot.lane.b32.xlu0 %v62, 32
    %v92 = vpop.permute.xlu0 %91
    %93 = vrot.lane.b32.xlu0 %v63, 32
    %v94 = vpop.permute.xlu0 %93
    %95 = vrot.lane.b32.xlu0 %v64, 32
    %v96 = vpop.permute.xlu0 %95
    %v97 = vlaneseq
    %v98 = vand.u32 %v97, 127
    %v99 = vand.u32 %v98, 63
    %vm100 = vcmp.lt.s32.totalorder %v99, 32
    %v101 = vmin.f32 %v57, %v66
    %v102 = vmin.f32 %v58, %v68
    %v103 = vmin.f32 %v59, %v70
    %v104 = vmin.f32 %v60, %v72
    %v105 = vmin.f32 %v61, %v74
    %v106 = vmin.f32 %v62, %v76
    %v107 = vmin.f32 %v63, %v78
    %v108 = vmin.f32 %v64, %v80
    %v109 = vmax.f32 %v57, %v82
    %v110 = vmax.f32 %v58, %v84
    %v111 = vmax.f32 %v59, %v86
    %v112 = vmax.f32 %v60, %v88
    %v113 = vmax.f32 %v61, %v90
    %v114 = vmax.f32 %v62, %v92
    %v115 = vmax.f32 %v63, %v94
    %v116 = vmax.f32 %v64, %v96
    %v117 = vsel %vm100, %v101, %v109
    %v118 = vsel %vm100, %v102, %v110
    %v119 = vsel %vm100, %v103, %v111
    %v120 = vsel %vm100, %v104, %v112
    %v121 = vsel %vm100, %v105, %v113
    %v122 = vsel %vm100, %v106, %v114
    %v123 = vsel %vm100, %v107, %v115
    %v124 = vsel %vm100, %v108, %v116
    %125 = vst [vmem:[#allocation5] sm:$0xff] %v117
    %126 = vst [vmem:[#allocation5 + $0x8] sm:$0xff] %v118
    %127 = vst [vmem:[#allocation5 + $0x10] sm:$0xff] %v119
    %128 = vst [vmem:[#allocation5 + $0x18] sm:$0xff] %v120
    %129 = vst [vmem:[#allocation5 + $0x20] sm:$0xff] %v121
    %130 = vst [vmem:[#allocation5 + $0x28] sm:$0xff] %v122
    %131 = vst [vmem:[#allocation5 + $0x30] sm:$0xff] %v123
    %132 = vst [vmem:[#allocation5 + $0x38] sm:$0xff] %v124
    // Predicated region
    $region10: #{tpu_custom_call.1} parent=1 // pred_check
      _
    $region11: #{tpu_custom_call.1} parent=1 // pred_check_branch
      %134 = sbr.rel (0) target = $region13
    $region12: #{tpu_custom_call.1} parent=1 // pred_region
      %136 = vsyncadd [#allocation4], 0
      %s137 = sshll.u32 [#allocation5], 4
      %s138 = int_to_ptr.vmem [resolvable:$true] %s137
      %s139 = sshll.u32 %s1, 4
      %s140 = int_to_ptr.hbm [resolvable:$true] %s139
      %145 = dma.vmem_to_hbm [thread:$0]  %s138, 1024, %s140, [#allocation4], 128, 128, 8
    $region13: #{tpu_custom_call.1} parent=1 // pred_fallthru
      _
    // Predicated region
    $region14: #{tpu_custom_call.1} parent=1 // pred_check
      _
    $region15: #{tpu_custom_call.1} parent=1 // pred_check_branch
      %147 = sbr.rel (0) target = $region17
    $region16: #{tpu_custom_call.1} parent=1 // pred_region
      %149 = dma.done [#allocation4], 1024
    $region17: #{tpu_custom_call.1} parent=1 // pred_fallthru
      _
    %150 = vsyncpa [#allocation3], 1
    %151 = vsyncpa [#allocation4], 1

</llo_original>
